<compile_context>
chip_gen: v5e
topology: v5e:2x2
jax: 0.10.0
libtpu: 0.0.40
codegen_flags: <defaults>
</compile_context>

<pallas_src>
import functools

import jax
import jax.numpy as jnp
from jax.experimental import pallas as pl
from jax.experimental.pallas import tpu as pltpu


def _round_up(v, m):
    return (v + m - 1) // m * m


def _cdiv(a, b):
    return -(-a // b)


def _mlp_kernel(x_ref, wfc_ref, bfc_ref, wproj_ref, bproj_ref, o_ref, acc_ref):
    # x_ref:    (tm, Hp)  native dtype (e.g. f32) — cast per tile on the VPU
    # wfc_ref:  (Hp, tk)  bf16 chunk of W_fc
    # bfc_ref:  (1, tk)   f32 chunk of b_fc
    # wproj_ref:(tk, Hp)  bf16 chunk of W_proj
    # bproj_ref:(1, Hp)   f32
    # o_ref:    (tm, Hp)  output (written only on the last k step)
    # acc_ref:  (tm, Hp)  f32 accumulator scratch
    k = pl.program_id(1)

    @pl.when(k == 0)
    def _():
        acc_ref[...] = jnp.zeros_like(acc_ref)

    # fc chunk: (tm, Hp) @ (Hp, tk) on the MXU, f32 accumulation, f32 bias.
    x = x_ref[...].astype(wfc_ref.dtype)
    h = jnp.dot(x, wfc_ref[...], preferred_element_type=jnp.float32) + bfc_ref[...]

    # GELU(approximate='tanh') in f32 on the (tm, tk) chunk:
    # 0.5*x*(1 + tanh(sqrt(2/pi)*(x + 0.044715*x^3)))
    c = 0.7978845608028654  # sqrt(2/pi)
    h = 0.5 * h * (1.0 + jnp.tanh(c * (h + 0.044715 * h * h * h)))

    # proj partial: (tm, tk) @ (tk, Hp), accumulated in f32.
    acc_ref[...] += jnp.dot(h.astype(wproj_ref.dtype), wproj_ref[...],
                            preferred_element_type=jnp.float32)

    @pl.when(k == pl.num_programs(1) - 1)
    def _():
        # proj bias + dropout (identity in eval mode) + cast to output dtype.
        o_ref[...] = (acc_ref[...] + bproj_ref[...]).astype(o_ref.dtype)


def prepare_mlp_params(w_fc, b_fc, w_proj, b_proj, *, tk_max=512,
                       compute_dtype=jnp.bfloat16):
    """One-time weight prep: bf16 cast + lane-dense (128) padding.

    w_fc: (H, 4H), b_fc: (4H,), w_proj: (4H, H), b_proj: (H,)  — (in, out) layout.
    Returns (wfc_p, bfc_p, wproj_p, bproj_p, tk) with H padded to a multiple of
    128 and 4H padded to n_k * tk (tk a multiple of 128, tk <= ~tk_max).
    """
    H, H4 = w_fc.shape
    Hp = _round_up(H, 128)
    n_k = max(1, _cdiv(H4, tk_max))
    tk = _round_up(_cdiv(H4, n_k), 128)
    H4p = tk * n_k

    wfc_p = jnp.pad(w_fc.astype(compute_dtype), ((0, Hp - H), (0, H4p - H4)))
    wproj_p = jnp.pad(w_proj.astype(compute_dtype), ((0, H4p - H4), (0, Hp - H)))
    bfc_p = jnp.pad(b_fc.astype(jnp.float32).reshape(1, H4),
                    ((0, 0), (0, H4p - H4)))
    bproj_p = jnp.pad(b_proj.astype(jnp.float32).reshape(1, H),
                      ((0, 0), (0, Hp - H)))
    return wfc_p, bfc_p, wproj_p, bproj_p, tk


def gpt2_mlp_block(x, wfc_p, bfc_p, wproj_p, bproj_p, *, tk, tm_max=256,
                   vmem_limit_bytes=48 * 1024 * 1024):
    """Fused GPT-2 MLP block. x: (B, S, H); weights from prepare_mlp_params()."""
    B, S, H = x.shape
    Hp, H4p = wfc_p.shape
    assert wproj_p.shape == (H4p, Hp) and H <= Hp
    assert H4p % tk == 0 and tk % 128 == 0

    M = B * S
    # Adaptive row tile: last tile stays mostly full (bounds padding waste).
    n_m = max(1, _cdiv(M, tm_max))
    tm = _round_up(_cdiv(M, n_m), 8)
    Mp = tm * n_m
    n_k = H4p // tk

    out_dtype = x.dtype
    x2 = x.reshape(M, H)
    if Mp != M or Hp != H:
        # Native-dtype zero pad (rows + lanes); the bf16 cast happens per tile
        # inside the kernel.
        x2 = jnp.pad(x2, ((0, Mp - M), (0, Hp - H)))

    nbytes = lambda a: a.size * a.dtype.itemsize
    weight_bytes = (nbytes(wfc_p) + nbytes(wproj_p)
                    + nbytes(bfc_p) + nbytes(bproj_p))
    cost = pl.CostEstimate(
        flops=4 * Mp * Hp * H4p,                    # two matmuls
        transcendentals=Mp * H4p,                   # one tanh per fc activation
        bytes_accessed=(nbytes(x2)
                        + Mp * Hp * jnp.dtype(out_dtype).itemsize
                        + n_m * weight_bytes),      # weight chunks re-read per row tile
    )

    grid_spec = pltpu.PrefetchScalarGridSpec(
        num_scalar_prefetch=0,
        grid=(n_m, n_k),                            # M parallel, k (reduction) last
        in_specs=[
            pl.BlockSpec((tm, Hp), lambda i, k: (i, 0)),   # x rows (held across k)
            pl.BlockSpec((Hp, tk), lambda i, k: (0, k)),   # W_fc chunk (streamed)
            pl.BlockSpec((1, tk), lambda i, k: (0, k)),    # b_fc chunk (streamed)
            pl.BlockSpec((tk, Hp), lambda i, k: (k, 0)),   # W_proj chunk (streamed)
            pl.BlockSpec((1, Hp), lambda i, k: (0, 0)),    # b_proj (resident)
        ],
        out_specs=pl.BlockSpec((tm, Hp), lambda i, k: (i, 0)),
        scratch_shapes=[pltpu.VMEM((tm, Hp), jnp.float32)],
    )

    out = pl.pallas_call(
        _mlp_kernel,
        out_shape=jax.ShapeDtypeStruct((Mp, Hp), out_dtype),
        grid_spec=grid_spec,
        compiler_params=pltpu.CompilerParams(
            dimension_semantics=("parallel", "arbitrary"),
            vmem_limit_bytes=vmem_limit_bytes),
        cost_estimate=cost,
    )(x2, wfc_p, bfc_p, wproj_p, bproj_p)

    return out[:M, :H].reshape(B, S, H)


if __name__ == "__main__":
    # Small shapes consistent with the module: batch=2, seq=8, hidden=32.
    B, S, H = 2, 8, 32
    H4 = 4 * H

    key = jax.random.PRNGKey(0)
    kx, kw1, kb1, kw2, kb2 = jax.random.split(key, 5)

    x = jax.random.normal(kx, (B, S, H), dtype=jnp.float32)
    # Parameters in (in, out) layout, matching nn.Linear(H,4H)/Linear(4H,H)
    # weights transposed (as the dump loader does).
    w_fc = jax.random.normal(kw1, (H, H4), dtype=jnp.float32) * 0.02
    b_fc = jax.random.normal(kb1, (H4,), dtype=jnp.float32) * 0.02
    w_proj = jax.random.normal(kw2, (H4, H), dtype=jnp.float32) * 0.02
    b_proj = jax.random.normal(kb2, (H,), dtype=jnp.float32) * 0.02

    # One-time weight prep (cast + pad) — hoisted out of the per-call path.
    wfc_p, bfc_p, wproj_p, bproj_p, tk = prepare_mlp_params(
        w_fc, b_fc, w_proj, b_proj)

    mlp = jax.jit(functools.partial(gpt2_mlp_block, tk=tk))
    y = mlp(x, wfc_p, bfc_p, wproj_p, bproj_p)
    jax.block_until_ready(y)

    # Reference check in plain JAX (f32; GELU tanh approximation), eval-mode dropout.
    def ref(x):
        h = x @ w_fc + b_fc
        c = 0.7978845608028654
        h = 0.5 * h * (1.0 + jnp.tanh(c * (h + 0.044715 * h ** 3)))
        return h @ w_proj + b_proj

    y_ref = ref(x)
    # bf16 matmul operands with f32 accumulation -> loosened tolerance vs f32 ref.
    assert jnp.allclose(y, y_ref, atol=5e-3, rtol=5e-2), "mismatch vs reference"

    print("KERNEL_OK")
</pallas_src>

<mosaic_0001>
module attributes {stable_mosaic.version = 11 : i64} {
  func.func @_mlp_kernel(%arg0: i32, %arg1: i32, %arg2: memref<16x128xf32, #tpu.memory_space<vmem>>, %arg3: memref<128x128xbf16, #tpu.memory_space<vmem>>, %arg4: memref<1x128xf32, #tpu.memory_space<vmem>>, %arg5: memref<128x128xbf16, #tpu.memory_space<vmem>>, %arg6: memref<1x128xf32, #tpu.memory_space<vmem>>, %arg7: memref<16x128xf32, #tpu.memory_space<vmem>>, %arg8: memref<16x128xf32, #tpu.memory_space<vmem>>) attributes {dimension_semantics = [#tpu.dimension_semantics<parallel>, #tpu.dimension_semantics<arbitrary>], iteration_bounds = array<i64: 1, 1>, scalar_prefetch = 0 : i64, scratch_operands = 1 : i64, tpu.core_type = #tpu.core_type<tc>, window_params = [{transform_indices = @transform_0, window_bounds = array<i64: 16, 128>}, {transform_indices = @transform_1, window_bounds = array<i64: 128, 128>}, {transform_indices = @transform_2, window_bounds = array<i64: 1, 128>}, {transform_indices = @transform_3, window_bounds = array<i64: 128, 128>}, {pipeline_mode = #tpu.pipeline_mode<synchronous>, transform_indices = @transform_4, window_bounds = array<i64: 1, 128>}, {transform_indices = @transform_5, window_bounds = array<i64: 16, 128>}]} {
    %c0_i32 = arith.constant 0 : i32
    %0 = arith.cmpi eq, %arg1, %c0_i32 : i32
    %1 = arith.extui %0 : i1 to i32
    %c0_i32_0 = arith.constant 0 : i32
    %2 = arith.cmpi ne, %1, %c0_i32_0 : i32
    scf.if %2 {
      %cst_19 = arith.constant 0.000000e+00 : f32
      %32 = vector.broadcast %cst_19 : f32 to vector<16x128xf32>
      %c0_20 = arith.constant 0 : index
      %c0_21 = arith.constant 0 : index
      %33 = vector.load %arg8[%c0_20, %c0_21] : memref<16x128xf32, #tpu.memory_space<vmem>>, vector<16x128xf32>
      tpu.vector_store %arg8[%c0_20, %c0_21], %32 {strides = array<i32>} : memref<16x128xf32, #tpu.memory_space<vmem>>, vector<16x128xf32>,
    } else {
    }
    %c0 = arith.constant 0 : index
    %c0_1 = arith.constant 0 : index
    %3 = vector.load %arg2[%c0, %c0_1] : memref<16x128xf32, #tpu.memory_space<vmem>>, vector<16x128xf32>
    %4 = arith.truncf %3 : vector<16x128xf32> to vector<16x128xbf16>
    %c0_2 = arith.constant 0 : index
    %c0_3 = arith.constant 0 : index
    %5 = vector.load %arg3[%c0_2, %c0_3] : memref<128x128xbf16, #tpu.memory_space<vmem>>, vector<128x128xbf16>
    %cst = arith.constant dense<0.000000e+00> : vector<16x128xf32>
    %6 = tpu.matmul %4, %5, %cst {dimension_numbers = #tpu.dot_dimension_numbers<[1], [0], [0], [1], [0, 0, 1, 1], [], []>} : vector<16x128xbf16>, vector<128x128xbf16>, vector<16x128xf32> -> vector<16x128xf32>
    %c0_4 = arith.constant 0 : index
    %c0_5 = arith.constant 0 : index
    %7 = vector.load %arg4[%c0_4, %c0_5] : memref<1x128xf32, #tpu.memory_space<vmem>>, vector<1x128xf32>
    %8 = vector.broadcast %7 : vector<1x128xf32> to vector<16x128xf32>
    %9 = arith.addf %6, %8 : vector<16x128xf32>
    %cst_6 = arith.constant 5.000000e-01 : f32
    %10 = vector.broadcast %cst_6 : f32 to vector<16x128xf32>
    %11 = arith.mulf %10, %9 : vector<16x128xf32>
    %cst_7 = arith.constant 4.471500e-02 : f32
    %12 = vector.broadcast %cst_7 : f32 to vector<16x128xf32>
    %13 = arith.mulf %12, %9 : vector<16x128xf32>
    %14 = arith.mulf %13, %9 : vector<16x128xf32>
    %15 = arith.mulf %14, %9 : vector<16x128xf32>
    %16 = arith.addf %9, %15 : vector<16x128xf32>
    %cst_8 = arith.constant 0.797884583 : f32
    %17 = vector.broadcast %cst_8 : f32 to vector<16x128xf32>
    %18 = arith.mulf %17, %16 : vector<16x128xf32>
    %19 = math.tanh %18 : vector<16x128xf32>
    %cst_9 = arith.constant 1.000000e+00 : f32
    %20 = vector.broadcast %cst_9 : f32 to vector<16x128xf32>
    %21 = arith.addf %20, %19 : vector<16x128xf32>
    %22 = arith.mulf %11, %21 : vector<16x128xf32>
    %c0_10 = arith.constant 0 : index
    %c0_11 = arith.constant 0 : index
    %23 = vector.load %arg8[%c0_10, %c0_11] : memref<16x128xf32, #tpu.memory_space<vmem>>, vector<16x128xf32>
    %24 = arith.truncf %22 : vector<16x128xf32> to vector<16x128xbf16>
    %c0_12 = arith.constant 0 : index
    %c0_13 = arith.constant 0 : index
    %25 = vector.load %arg5[%c0_12, %c0_13] : memref<128x128xbf16, #tpu.memory_space<vmem>>, vector<128x128xbf16>
    %cst_14 = arith.constant dense<0.000000e+00> : vector<16x128xf32>
    %26 = tpu.matmul %24, %25, %cst_14 {dimension_numbers = #tpu.dot_dimension_numbers<[1], [0], [0], [1], [0, 0, 1, 1], [], []>} : vector<16x128xbf16>, vector<128x128xbf16>, vector<16x128xf32> -> vector<16x128xf32>
    %27 = arith.addf %23, %26 : vector<16x128xf32>
    %c0_15 = arith.constant 0 : index
    %c0_16 = arith.constant 0 : index
    %28 = vector.load %arg8[%c0_15, %c0_16] : memref<16x128xf32, #tpu.memory_space<vmem>>, vector<16x128xf32>
    tpu.vector_store %arg8[%c0_15, %c0_16], %27 {strides = array<i32>} : memref<16x128xf32, #tpu.memory_space<vmem>>, vector<16x128xf32>,
    %c0_i32_17 = arith.constant 0 : i32
    %29 = arith.cmpi eq, %arg1, %c0_i32_17 : i32
    %30 = arith.extui %29 : i1 to i32
    %c0_i32_18 = arith.constant 0 : i32
    %31 = arith.cmpi ne, %30, %c0_i32_18 : i32
    scf.if %31 {
      %c0_19 = arith.constant 0 : index
      %c0_20 = arith.constant 0 : index
      %32 = vector.load %arg8[%c0_19, %c0_20] : memref<16x128xf32, #tpu.memory_space<vmem>>, vector<16x128xf32>
      %c0_21 = arith.constant 0 : index
      %c0_22 = arith.constant 0 : index
      %33 = vector.load %arg6[%c0_21, %c0_22] : memref<1x128xf32, #tpu.memory_space<vmem>>, vector<1x128xf32>
      %34 = vector.broadcast %33 : vector<1x128xf32> to vector<16x128xf32>
      %35 = arith.addf %32, %34 : vector<16x128xf32>
      %c0_23 = arith.constant 0 : index
      %c0_24 = arith.constant 0 : index
      %36 = vector.load %arg7[%c0_23, %c0_24] : memref<16x128xf32, #tpu.memory_space<vmem>>, vector<16x128xf32>
      tpu.vector_store %arg7[%c0_23, %c0_24], %35 {strides = array<i32>} : memref<16x128xf32, #tpu.memory_space<vmem>>, vector<16x128xf32>,
    } else {
    }
    return
  }
  func.func @transform_0(%arg0: i32, %arg1: i32) -> (i32, i32) {
    %c0_i32 = arith.constant 0 : i32
    %c0_i32_0 = arith.constant 0 : i32
    return %arg0, %c0_i32 : i32, i32
  }
  func.func @transform_1(%arg0: i32, %arg1: i32) -> (i32, i32) {
    %c0_i32 = arith.constant 0 : i32
    %c0_i32_0 = arith.constant 0 : i32
    return %c0_i32, %arg1 : i32, i32
  }
  func.func @transform_2(%arg0: i32, %arg1: i32) -> (i32, i32) {
    %c0_i32 = arith.constant 0 : i32
    %c0_i32_0 = arith.constant 0 : i32
    return %c0_i32, %arg1 : i32, i32
  }
  func.func @transform_3(%arg0: i32, %arg1: i32) -> (i32, i32) {
    %c0_i32 = arith.constant 0 : i32
    %c0_i32_0 = arith.constant 0 : i32
    return %arg1, %c0_i32 : i32, i32
  }
  func.func @transform_4(%arg0: i32, %arg1: i32) -> (i32, i32) {
    %c0_i32 = arith.constant 0 : i32
    %c0_i32_0 = arith.constant 0 : i32
    %c0_i32_1 = arith.constant 0 : i32
    return %c0_i32, %c0_i32_0 : i32, i32
  }
  func.func @transform_5(%arg0: i32, %arg1: i32) -> (i32, i32) {
    %c0_i32 = arith.constant 0 : i32
    %c0_i32_0 = arith.constant 0 : i32
    return %arg0, %c0_i32 : i32, i32
  }
}

</mosaic_0001>

<llo_original>
// kernel: gpt2_mlp_block.1
$region0: #{gpt2_mlp_block.1}
  #allocation0 [shape = 'u32[]', space=smem, size = 0x4, offset = 0x4, fixed_abs, tag = 'smem constant byte address 0x4 - core index']
  #allocation1 [shape = 'u32[72,128]{1,0:T(1,128)}', space=vmem, size = 0x9000, scoped, tag = 'internal scratch']
  #allocation2 [shape = 'f32[16,128]{1,0:T(8,128)}', space=vmem, size = 0x2000, scoped, tag = 'scratch operand']
  %s0 = inlined_call_operand.vmem [shape: f32[16,128], index: 0, kind: input, shape index: {}]
  %s1 = inlined_call_operand.hbm [shape: bf16[128,128], index: 1, kind: input, shape index: {}]
  %s2 = inlined_call_operand.vmem [shape: f32[1,128], index: 2, kind: input, shape index: {}]
  %s3 = inlined_call_operand.hbm [shape: bf16[128,128], index: 3, kind: input, shape index: {}]
  %s4 = inlined_call_operand.vmem [shape: f32[1,128], index: 4, kind: input, shape index: {}]
  %s5 = inlined_call_operand.vmem [shape: f32[16,128], index: 5, kind: output, shape index: {}]
  %s6 = sld [smem:[#allocation0]]
  $region46: #{gpt2_mlp_block.1} parent=0
    _
  %s8 = ssub.s32 1, %s6
  %s9 = scalar_select 0, %s8, %s6
  $region1: #{gpt2_mlp_block.1} parent=0
    #allocation3 [shape = 'u8[32768]{0}', space=vmem, size = 0x8000, scoped, tag = 'input window, operand 1, single buffered']
    #allocation4 [shape = 's32[1]{0}', space=sflag, size = 0x4, scoped, tag = 'scoped memory for gpt2_mlp_block.1']
    #allocation5 [shape = 'u8[32768]{0}', space=vmem, size = 0x8000, scoped, tag = 'input window, operand 3, single buffered']
    #allocation6 [shape = 's32[1]{0}', space=sflag, size = 0x4, scoped, tag = 'scoped memory for gpt2_mlp_block.1']
    %10 = vsyncpa [#allocation4], 0
    %11 = vsyncpa [#allocation6], 0
    // Predicated region
    $region2: #{gpt2_mlp_block.1} parent=1 // pred_check
      _
    $region3: #{gpt2_mlp_block.1} parent=1 // pred_check_branch
      %13 = sbr.rel (0) target = $region5
    $region4: #{gpt2_mlp_block.1} parent=1 // pred_region
      _
    $region5: #{gpt2_mlp_block.1} parent=1 // pred_fallthru
      _
    // Predicated region
    $region6: #{gpt2_mlp_block.1} parent=1 // pred_check
      _
    $region7: #{gpt2_mlp_block.1} parent=1 // pred_check_branch
      %15 = sbr.rel (0) target = $region9
    $region8: #{gpt2_mlp_block.1} parent=1 // pred_region
      %17 = vsyncadd [#allocation4], 0
      %s18 = sshll.u32 %s1, 4
      %s19 = int_to_ptr.hbm [resolvable:$true] %s18
      %s20 = sshll.u32 [#allocation3], 4
      %s21 = int_to_ptr.vmem [resolvable:$true] %s20
      %26 = dma.hbm_to_vmem [thread:$0]  %s19, 1024, %s21, [#allocation4], 64, 64, 4
    $region9: #{gpt2_mlp_block.1} parent=1 // pred_fallthru
      _
    // Predicated region
    $region10: #{gpt2_mlp_block.1} parent=1 // pred_check
      _
    $region11: #{gpt2_mlp_block.1} parent=1 // pred_check_branch
      %28 = sbr.rel (0) target = $region13
    $region12: #{gpt2_mlp_block.1} parent=1 // pred_region
      _
    $region13: #{gpt2_mlp_block.1} parent=1 // pred_fallthru
      _
    // Predicated region
    $region14: #{gpt2_mlp_block.1} parent=1 // pred_check
      _
    $region15: #{gpt2_mlp_block.1} parent=1 // pred_check_branch
      %30 = sbr.rel (0) target = $region17
    $region16: #{gpt2_mlp_block.1} parent=1 // pred_region
      %32 = vsyncadd [#allocation6], 0
      %s33 = sshll.u32 %s3, 4
      %s34 = int_to_ptr.hbm [resolvable:$true] %s33
      %s35 = sshll.u32 [#allocation5], 4
      %s36 = int_to_ptr.vmem [resolvable:$true] %s35
      %41 = dma.hbm_to_vmem [thread:$0]  %s34, 1024, %s36, [#allocation6], 64, 64, 4
    $region17: #{gpt2_mlp_block.1} parent=1 // pred_fallthru
      _
    // Predicated region
    $region18: #{gpt2_mlp_block.1} parent=1 // pred_check
      _
    $region19: #{gpt2_mlp_block.1} parent=1 // pred_check_branch
      %43 = sbr.rel (0) target = $region21
    $region20: #{gpt2_mlp_block.1} parent=1 // pred_region
      _
    $region21: #{gpt2_mlp_block.1} parent=1 // pred_fallthru
      _
    // Predicated region
    $region22: #{gpt2_mlp_block.1} parent=1 // pred_check
      _
    $region23: #{gpt2_mlp_block.1} parent=1 // pred_check_branch
      %45 = sbr.rel (0) target = $region25
    $region24: #{gpt2_mlp_block.1} parent=1 // pred_region
      %47 = dma.done [#allocation4], 1024
    $region25: #{gpt2_mlp_block.1} parent=1 // pred_fallthru
      _
    // Predicated region
    $region26: #{gpt2_mlp_block.1} parent=1 // pred_check
      _
    $region27: #{gpt2_mlp_block.1} parent=1 // pred_check_branch
      %49 = sbr.rel (0) target = $region29
    $region28: #{gpt2_mlp_block.1} parent=1 // pred_region
      %51 = dma.done [#allocation6], 1024
    $region29: #{gpt2_mlp_block.1} parent=1 // pred_fallthru
      _
    %p52 = scmp.eq.s32.totalorder 0, 0
    // Predicated region
    $region30: #{gpt2_mlp_block.1} parent=1 // pred_check
      %p53 = pneg %p52
    $region31: #{gpt2_mlp_block.1} parent=1 // pred_check_branch
      %55 = sbr.rel (%p53) target = $region33
    $region32: #{gpt2_mlp_block.1} parent=1 // pred_region
      %56 = vst [vmem:[#allocation2] sm:$0xff] 0.0
      %57 = vst [vmem:[#allocation2 + $0x8] sm:$0xff] 0.0
    $region33: #{gpt2_mlp_block.1} parent=1 // pred_fallthru
      _
    %v58 = vld [vmem:[%s0] sm:$0xff]
    %v59 = vld [vmem:[%s0 + $0x8] sm:$0xff]
    %v60 = vpack.c.bf16 %v59, %v58
    %v61 = vld [vmem:[#allocation3] sm:$0xf]
    %v62 = vld [vmem:[#allocation3 + $0x4] sm:$0xf]
    %v63 = vld [vmem:[#allocation3 + $0x8] sm:$0xf]
    %v64 = vld [vmem:[#allocation3 + $0xc] sm:$0xf]
    %v65 = vld [vmem:[#allocation3 + $0x10] sm:$0xf]
    %v66 = vld [vmem:[#allocation3 + $0x14] sm:$0xf]
    %v67 = vld [vmem:[#allocation3 + $0x18] sm:$0xf]
    %v68 = vld [vmem:[#allocation3 + $0x1c] sm:$0xf]
    %v69 = vld [vmem:[#allocation3 + $0x20] sm:$0xf]
    %v70 = vld [vmem:[#allocation3 + $0x24] sm:$0xf]
    %v71 = vld [vmem:[#allocation3 + $0x28] sm:$0xf]
    %v72 = vld [vmem:[#allocation3 + $0x2c] sm:$0xf]
    %v73 = vld [vmem:[#allocation3 + $0x30] sm:$0xf]
    %v74 = vld [vmem:[#allocation3 + $0x34] sm:$0xf]
    %v75 = vld [vmem:[#allocation3 + $0x38] sm:$0xf]
    %v76 = vld [vmem:[#allocation3 + $0x3c] sm:$0xf]
    %v77 = vld [vmem:[%s2] sm:$0x1]
    %v79 = vperm.slane %v77, 0
    %v97 = vunpack.c.l.b16 %v61
    %v98 = vunpack.c.l.b16 %v62
    %v99 = vunpack.c.l.b16 %v63
    %v100 = vunpack.c.l.b16 %v64
    %v101 = vunpack.c.l.b16 %v65
    %v102 = vunpack.c.l.b16 %v66
    %v103 = vunpack.c.l.b16 %v67
    %v104 = vunpack.c.l.b16 %v68
    %v105 = vunpack.c.l.b16 %v69
    %v106 = vunpack.c.l.b16 %v70
    %v107 = vunpack.c.l.b16 %v71
    %v108 = vunpack.c.l.b16 %v72
    %v109 = vunpack.c.l.b16 %v73
    %v110 = vunpack.c.l.b16 %v74
    %v111 = vunpack.c.l.b16 %v75
    %v112 = vunpack.c.l.b16 %v76
    %v113 = vpack.c.b16 %v98, %v97
    %v114 = vpack.c.b16 %v100, %v99
    %v115 = vpack.c.b16 %v102, %v101
    %v116 = vpack.c.b16 %v104, %v103
    %v117 = vpack.c.b16 %v106, %v105
    %v118 = vpack.c.b16 %v108, %v107
    %v119 = vpack.c.b16 %v110, %v109
    %v120 = vpack.c.b16 %v112, %v111
    %129 = vmatpush.bf16.msra.mxu0 %v120
    %130 = vmatpush.bf16.msra.mxu0 %v119
    %131 = vmatpush.bf16.msra.mxu0 %v118
    %132 = vmatpush.bf16.msra.mxu0 %v117
    %133 = vmatpush.bf16.msra.mxu0 %v116
    %134 = vmatpush.bf16.msra.mxu0 %v115
    %135 = vmatpush.bf16.msra.mxu0 %v114
    %136 = vmatpush.bf16.msra.mxu0 %v113
    %137 = vmatmul.bf16.gmra.mxu0 %v60
    %v138 = vpop.f32.mrf.mxu0
    %v139 = vadd.f32 %v79, %v138
    %v140 = vpop.f32.mrf.mxu0
    %v141 = vadd.f32 %v79, %v140
    %142 = vdwg.mxu0
    %v143 = vmul.f32 %v139, 0.5
    %v144 = vmul.f32 %v141, 0.5
    %v145 = vmul.f32 %v139, 0.044715
    %v146 = vmul.f32 %v141, 0.044715
    %v147 = vmul.f32 %v145, %v139
    %v148 = vmul.f32 %v146, %v141
    %v149 = vmul.f32 %v147, %v139
    %v150 = vmul.f32 %v148, %v141
    %v151 = vadd.f32 %v139, %v149
    %v152 = vadd.f32 %v141, %v150
    %v153 = vmul.f32 %v151, 0.7978846
    %v154 = vmul.f32 %v152, 0.7978846
    %v155 = vtanh.pop %v153
    %v156 = vtanh.pop %v154
    %v157 = vadd.f32 %v155, 1.0
    %v158 = vadd.f32 %v156, 1.0
    %v159 = vmul.f32 %v143, %v157
    %v160 = vmul.f32 %v144, %v158
    %v161 = vld [vmem:[#allocation2] sm:$0xff]
    %v162 = vld [vmem:[#allocation2 + $0x8] sm:$0xff]
    %v163 = vpack.c.bf16 %v160, %v159
    %v164 = vld [vmem:[#allocation5] sm:$0xf]
    %v165 = vld [vmem:[#allocation5 + $0x4] sm:$0xf]
    %v166 = vld [vmem:[#allocation5 + $0x8] sm:$0xf]
    %v167 = vld [vmem:[#allocation5 + $0xc] sm:$0xf]
    %v168 = vld [vmem:[#allocation5 + $0x10] sm:$0xf]
    %v169 = vld [vmem:[#allocation5 + $0x14] sm:$0xf]
    %v170 = vld [vmem:[#allocation5 + $0x18] sm:$0xf]
    %v171 = vld [vmem:[#allocation5 + $0x1c] sm:$0xf]
    %v172 = vld [vmem:[#allocation5 + $0x20] sm:$0xf]
    %v173 = vld [vmem:[#allocation5 + $0x24] sm:$0xf]
    %v174 = vld [vmem:[#allocation5 + $0x28] sm:$0xf]
    %v175 = vld [vmem:[#allocation5 + $0x2c] sm:$0xf]
    %v176 = vld [vmem:[#allocation5 + $0x30] sm:$0xf]
    %v177 = vld [vmem:[#allocation5 + $0x34] sm:$0xf]
    %v178 = vld [vmem:[#allocation5 + $0x38] sm:$0xf]
    %v179 = vld [vmem:[#allocation5 + $0x3c] sm:$0xf]
    %v196 = vunpack.c.l.b16 %v164
    %v197 = vunpack.c.l.b16 %v165
    %v198 = vunpack.c.l.b16 %v166
    %v199 = vunpack.c.l.b16 %v167
    %v200 = vunpack.c.l.b16 %v168
    %v201 = vunpack.c.l.b16 %v169
    %v202 = vunpack.c.l.b16 %v170
    %v203 = vunpack.c.l.b16 %v171
    %v204 = vunpack.c.l.b16 %v172
    %v205 = vunpack.c.l.b16 %v173
    %v206 = vunpack.c.l.b16 %v174
    %v207 = vunpack.c.l.b16 %v175
    %v208 = vunpack.c.l.b16 %v176
    %v209 = vunpack.c.l.b16 %v177
    %v210 = vunpack.c.l.b16 %v178
    %v211 = vunpack.c.l.b16 %v179
    %v212 = vpack.c.b16 %v197, %v196
    %v213 = vpack.c.b16 %v199, %v198
    %v214 = vpack.c.b16 %v201, %v200
    %v215 = vpack.c.b16 %v203, %v202
    %v216 = vpack.c.b16 %v205, %v204
    %v217 = vpack.c.b16 %v207, %v206
    %v218 = vpack.c.b16 %v209, %v208
    %v219 = vpack.c.b16 %v211, %v210
    %228 = vmatpush.bf16.msra.mxu0 %v219
    %229 = vmatpush.bf16.msra.mxu0 %v218
    %230 = vmatpush.bf16.msra.mxu0 %v217
    %231 = vmatpush.bf16.msra.mxu0 %v216
    %232 = vmatpush.bf16.msra.mxu0 %v215
    %233 = vmatpush.bf16.msra.mxu0 %v214
    %234 = vmatpush.bf16.msra.mxu0 %v213
    %235 = vmatpush.bf16.msra.mxu0 %v212
    %236 = vmatmul.bf16.gmra.mxu0 %v163
    %v237 = vpop.f32.mrf.mxu0
    %v238 = vadd.f32 0.0, %v237
    %v239 = vpop.f32.mrf.mxu0
    %v240 = vadd.f32 0.0, %v239
    %241 = vdwg.mxu0
    %v242 = vadd.f32 %v161, %v238
    %v243 = vadd.f32 %v162, %v240
    %244 = vst [vmem:[#allocation2] sm:$0xff] %v242
    %245 = vst [vmem:[#allocation2 + $0x8] sm:$0xff] %v243
    // Predicated region
    $region34: #{gpt2_mlp_block.1} parent=1 // pred_check
      %p246 = pneg %p52
    $region35: #{gpt2_mlp_block.1} parent=1 // pred_check_branch
      %248 = sbr.rel (%p246) target = $region37
    $region36: #{gpt2_mlp_block.1} parent=1 // pred_region
      %v249 = vld [vmem:[#allocation2] sm:$0xff]
      %v250 = vld [vmem:[#allocation2 + $0x8] sm:$0xff]
      %v251 = vld [vmem:[%s4] sm:$0x1]
      %v253 = vperm.slane %v251, 0
      %v255 = vadd.f32 %v249, %v253
      %v256 = vadd.f32 %v250, %v253
      %257 = vst [vmem:[%s5] sm:$0xff] %v255
      %258 = vst [vmem:[%s5 + $0x8] sm:$0xff] %v256
    $region37: #{gpt2_mlp_block.1} parent=1 // pred_fallthru
      _
    // Predicated region
    $region38: #{gpt2_mlp_block.1} parent=1 // pred_check
      _
    $region39: #{gpt2_mlp_block.1} parent=1 // pred_check_branch
      %260 = sbr.rel (0) target = $region41
    $region40: #{gpt2_mlp_block.1} parent=1 // pred_region
      _
    $region41: #{gpt2_mlp_block.1} parent=1 // pred_fallthru
      _
    // Predicated region
    $region42: #{gpt2_mlp_block.1} parent=1 // pred_check
      _
    $region43: #{gpt2_mlp_block.1} parent=1 // pred_check_branch
      %262 = sbr.rel (0) target = $region45
    $region44: #{gpt2_mlp_block.1} parent=1 // pred_region
      _
    $region45: #{gpt2_mlp_block.1} parent=1 // pred_fallthru
      _
    %263 = vsyncpa [#allocation4], 1
    %264 = vsyncpa [#allocation6], 1

</llo_original>
